<compile_context>
chip_gen: v7x
topology: tpu7x:2x2x1
jax: 0.10.0
libtpu: 0.0.40
codegen_flags: <defaults>
</compile_context>

<pallas_src>
import functools

import jax
import jax.numpy as jnp
from jax.experimental import pallas as pl
from jax.experimental.pallas import tpu as pltpu


# Total double-buffered tile VMEM budget per grid step. Conservative enough for
# v7x (64 MiB physical / 32 MiB scoped per TC) while still yielding ~4-9 MiB
# input tiles on v5e/v6e.
_VMEM_TILE_BUDGET = 24 << 20


def _round_up(v, m):
    return (v + m - 1) // m * m


def _combine_kernel(x_ref, w_ref, b_ref, out_x_ref, out_p_ref, *, node_emb_sz):
    D = node_emb_sz
    # Compute in f32 regardless of storage dtype (matches PyTorch fp32 math;
    # mandatory on v5e whose VPU/EUP have no bf16).
    x = x_ref[...].astype(jnp.float32)            # (TB, 3*D)
    feat = x[:, 0:D]
    nodeL = x[:, D:2 * D]
    nodeR = x[:, 2 * D:3 * D]

    # sigmoid(z) == 0.5*(tanh(z/2)+1): a single EUP transcendental per element
    # instead of exp + divide.
    gate = 0.5 * (jnp.tanh(0.5 * feat) + 1.0)
    combined = nodeR + gate * (nodeL - nodeR)     # (TB, D), 3 VPU ops

    # Linear(D, 1): K=D, N=1 is <1% MXU utilization -> VPU multiply + XLU reduce.
    w = w_ref[...].astype(jnp.float32)            # (1, D) broadcast row
    p = jnp.sum(combined * w, axis=-1, keepdims=True) + b_ref[0]   # (TB, 1)

    out_x_ref[...] = combined.astype(out_x_ref.dtype)
    # Note: (TB,1) stores are lane-sparse (vst.msk). Making p lane-dense would
    # need TB % 128 == 0 plus an in-kernel relayout; left out as the traffic is
    # ~1/(3D) of the input bytes.
    out_p_ref[...] = p.astype(out_p_ref.dtype)


def _choose_batch_tile(B, row_bytes, sublane, budget_bytes, min_steps=2):
    """Batch rows per grid step: VMEM-budget-capped, sublane-aligned, >=2 steps."""
    if B <= sublane:
        return B                                   # full extent (always legal)

    # (1) VMEM budget cap (row_bytes already includes double-buffering + padding).
    tb = max(sublane, (budget_bytes // max(row_bytes, 1)) // sublane * sublane)

    # (2) Guarantee >= min_steps grid steps so the software pipeline can overlap
    #     DMA with compute and v7x's two TensorCores both get work.
    per_step = _round_up(pl.cdiv(B, min_steps), sublane)
    tb = min(tb, max(sublane, per_step))

    # (3) Prefer a nearby tile that divides B exactly (no ragged padded tail,
    #     balanced core split). Only search a small neighborhood.
    if B % tb != 0:
        lo = max(sublane, (3 * tb) // 4)
        for cand in range(tb, lo - 1, -sublane):
            if B % cand == 0:
                tb = cand
                break
    return tb


def naive_combine_embedder(x, w, b, *, node_emb_sz):
    """x: (B, 3*node_emb_sz), w: (node_emb_sz, 1), b: (1,) or (1, 1)."""
    B = x.shape[0]
    D = node_emb_sz
    assert x.shape[-1] == 3 * D

    in_dt = x.dtype
    p_dt = jnp.promote_types(x.dtype, w.dtype)   # fp32 Linear params -> fp32 p
    in_isz = jnp.dtype(in_dt).itemsize
    p_isz = jnp.dtype(p_dt).itemsize

    w_row = jnp.reshape(w, (1, D)).astype(p_dt)   # broadcast row for the VPU reduce
    b_vec = jnp.reshape(b, (1,)).astype(jnp.float32)   # scalar bias -> SMEM

    # Sublane packing multiple: 8 for f32, 16 for bf16, 32 for int8/fp8.
    sublane = max(8, 32 // in_isz)

    # Per-batch-row VMEM cost of one grid step: x tile + out_x tile + out_p tile,
    # lane-padded to 128 and double-buffered by the pipeline.
    row_bytes = 2 * (_round_up(3 * D, 128) * in_isz
                     + _round_up(D, 128) * in_isz
                     + 128 * p_isz)

    TB = _choose_batch_tile(B, row_bytes, sublane, _VMEM_TILE_BUDGET)
    grid = (pl.cdiv(B, TB),)

    # Raise the scoped-VMEM limit so the larger tiles aren't clipped by the
    # 16 MiB (v5e) / 32 MiB (v6e/v7x) defaults; stay well under physical VMEM.
    vmem_need = TB * row_bytes + 2 * _round_up(D, 128) * 4 + (1 << 20)
    vmem_limit = int(min(max(vmem_need + (8 << 20), 32 << 20), 48 << 20))

    cost = pl.CostEstimate(
        flops=int(7 * B * D),                     # 3 combine + ~2 per reduce elem
        transcendentals=int(B * D),               # one tanh per gate element
        bytes_accessed=int(B * 3 * D * in_isz + B * D * in_isz
                           + B * p_isz + D * 4),
    )

    kernel = functools.partial(_combine_kernel, node_emb_sz=D)

    out_x, out_p = pl.pallas_call(
        kernel,
        out_shape=(
            jax.ShapeDtypeStruct((B, D), in_dt),
            jax.ShapeDtypeStruct((B, 1), p_dt),
        ),
        grid_spec=pl.GridSpec(
            grid=grid,
            in_specs=[
                pl.BlockSpec((TB, 3 * D), lambda i: (i, 0)),          # x tile
                pl.BlockSpec((1, D), lambda i: (0, 0)),               # weight row
                pl.BlockSpec(memory_space=pltpu.MemorySpace.SMEM),    # bias scalar
            ],
            out_specs=[
                pl.BlockSpec((TB, D), lambda i: (i, 0)),
                pl.BlockSpec((TB, 1), lambda i: (i, 0)),
            ],
        ),
        compiler_params=pltpu.CompilerParams(
            dimension_semantics=("parallel",),    # batch tiles are independent
            vmem_limit_bytes=vmem_limit,
        ),
        cost_estimate=cost,
    )(x, w_row, b_vec)
    return out_x, out_p


def _reference(x, w, b):
    feat, nodeL, nodeR = jnp.split(x.astype(jnp.float32), 3, axis=-1)
    gate = jax.nn.sigmoid(feat)
    ref_x = gate * nodeL + (1.0 - gate) * nodeR
    ref_p = ref_x @ w.astype(jnp.float32) + b.astype(jnp.float32)
    return ref_x, ref_p


if __name__ == "__main__":
    node_emb_sz = 32

    key = jax.random.PRNGKey(0)
    kx, kw, kb, kx2 = jax.random.split(key, 4)

    # Deterministic parameter init for nn.Linear(node_emb_sz, 1)
    bound = 1.0 / (node_emb_sz ** 0.5)
    w = jax.random.uniform(kw, (node_emb_sz, 1), jnp.float32, -bound, bound)
    b = jax.random.uniform(kb, (1,), jnp.float32, -bound, bound)

    # Small single-tile case (grid = 1).
    batch = 8
    x = jax.random.normal(kx, (batch, 3 * node_emb_sz), dtype=jnp.float32)
    out_x, out_p = naive_combine_embedder(x, w, b, node_emb_sz=node_emb_sz)
    jax.block_until_ready((out_x, out_p))

    ref_x, ref_p = _reference(x, w, b)
    assert out_x.shape == (batch, node_emb_sz)
    assert out_p.shape == (batch, 1)
    assert jnp.allclose(out_x, ref_x, atol=1e-5, rtol=1e-5)
    assert jnp.allclose(out_p, ref_p, atol=1e-5, rtol=1e-5)

    # Multi-tile case (exercises the >=2-step pipelined grid path).
    batch2 = 64
    x2 = jax.random.normal(kx2, (batch2, 3 * node_emb_sz), dtype=jnp.float32)
    out_x2, out_p2 = naive_combine_embedder(x2, w, b, node_emb_sz=node_emb_sz)
    jax.block_until_ready((out_x2, out_p2))

    ref_x2, ref_p2 = _reference(x2, w, b)
    assert jnp.allclose(out_x2, ref_x2, atol=1e-5, rtol=1e-5)
    assert jnp.allclose(out_p2, ref_p2, atol=1e-5, rtol=1e-5)

    print("KERNEL_OK")
</pallas_src>

<mosaic_0001>
module attributes {stable_mosaic.version = 11 : i64} {
  func.func @_combine_kernel(%arg0: i32, %arg1: memref<8x96xf32, #tpu.memory_space<vmem>>, %arg2: memref<1x32xf32, #tpu.memory_space<vmem>>, %arg3: memref<1xf32, #tpu.memory_space<smem>>, %arg4: memref<8x32xf32, #tpu.memory_space<vmem>>, %arg5: memref<8x1xf32, #tpu.memory_space<vmem>>) attributes {dimension_semantics = [#tpu.dimension_semantics<parallel>], iteration_bounds = array<i64: 1>, scalar_prefetch = 0 : i64, scratch_operands = 0 : i64, tpu.core_type = #tpu.core_type<tc>, window_params = [{transform_indices = @transform_0, window_bounds = array<i64: 8, 96>}, {pipeline_mode = #tpu.pipeline_mode<synchronous>, transform_indices = @transform_1, window_bounds = array<i64: 1, 32>}, {transform_indices = @transform_2, window_bounds = array<i64: 1>}, {transform_indices = @transform_3, window_bounds = array<i64: 8, 32>}, {transform_indices = @transform_4, window_bounds = array<i64: 8, 1>}]} {
    %c0 = arith.constant 0 : index
    %c0_0 = arith.constant 0 : index
    %0 = vector.load %arg1[%c0, %c0_0] : memref<8x96xf32, #tpu.memory_space<vmem>>, vector<8x96xf32>
    %1 = vector.extract_strided_slice %0 {offsets = [0, 0], sizes = [8, 32], strides = [1, 1]} : vector<8x96xf32> to vector<8x32xf32>
    %2 = vector.extract_strided_slice %0 {offsets = [0, 32], sizes = [8, 32], strides = [1, 1]} : vector<8x96xf32> to vector<8x32xf32>
    %3 = vector.extract_strided_slice %0 {offsets = [0, 64], sizes = [8, 32], strides = [1, 1]} : vector<8x96xf32> to vector<8x32xf32>
    %cst = arith.constant 5.000000e-01 : f32
    %4 = vector.broadcast %cst : f32 to vector<8x32xf32>
    %5 = arith.mulf %4, %1 : vector<8x32xf32>
    %6 = math.tanh %5 : vector<8x32xf32>
    %cst_1 = arith.constant 1.000000e+00 : f32
    %7 = vector.broadcast %cst_1 : f32 to vector<8x32xf32>
    %8 = arith.addf %6, %7 : vector<8x32xf32>
    %cst_2 = arith.constant 5.000000e-01 : f32
    %9 = vector.broadcast %cst_2 : f32 to vector<8x32xf32>
    %10 = arith.mulf %9, %8 : vector<8x32xf32>
    %11 = arith.subf %2, %3 : vector<8x32xf32>
    %12 = arith.mulf %10, %11 : vector<8x32xf32>
    %13 = arith.addf %3, %12 : vector<8x32xf32>
    %c0_3 = arith.constant 0 : index
    %c0_4 = arith.constant 0 : index
    %14 = vector.load %arg2[%c0_3, %c0_4] : memref<1x32xf32, #tpu.memory_space<vmem>>, vector<1x32xf32>
    %15 = vector.broadcast %14 : vector<1x32xf32> to vector<8x32xf32>
    %16 = arith.mulf %13, %15 : vector<8x32xf32>
    %cst_5 = arith.constant dense<0.000000e+00> : vector<8xf32>
    %17 = vector.multi_reduction <add>, %16, %cst_5 [1] : vector<8x32xf32> to vector<8xf32>
    %18 = vector.shape_cast %17 : vector<8xf32> to vector<8x1xf32>
    %c0_6 = arith.constant 0 : index
    %19 = memref.load %arg3[%c0_6] : memref<1xf32, #tpu.memory_space<smem>>
    %20 = vector.broadcast %19 : f32 to vector<8x1xf32>
    %21 = arith.addf %18, %20 : vector<8x1xf32>
    %c0_7 = arith.constant 0 : index
    %c0_8 = arith.constant 0 : index
    %22 = vector.load %arg4[%c0_7, %c0_8] : memref<8x32xf32, #tpu.memory_space<vmem>>, vector<8x32xf32>
    tpu.vector_store %arg4[%c0_7, %c0_8], %13 {strides = array<i32>} : memref<8x32xf32, #tpu.memory_space<vmem>>, vector<8x32xf32>,
    %c0_9 = arith.constant 0 : index
    %c0_10 = arith.constant 0 : index
    %23 = vector.load %arg5[%c0_9, %c0_10] : memref<8x1xf32, #tpu.memory_space<vmem>>, vector<8x1xf32>
    tpu.vector_store %arg5[%c0_9, %c0_10], %21 {strides = array<i32>} : memref<8x1xf32, #tpu.memory_space<vmem>>, vector<8x1xf32>,
    return
  }
  func.func @transform_0(%arg0: i32) -> (i32, i32) {
    %c0_i32 = arith.constant 0 : i32
    %c0_i32_0 = arith.constant 0 : i32
    return %arg0, %c0_i32 : i32, i32
  }
  func.func @transform_1(%arg0: i32) -> (i32, i32) {
    %c0_i32 = arith.constant 0 : i32
    %c0_i32_0 = arith.constant 0 : i32
    %c0_i32_1 = arith.constant 0 : i32
    return %c0_i32, %c0_i32_0 : i32, i32
  }
  func.func @transform_2(%arg0: i32) -> i32 {
    %c0_i32 = arith.constant 0 : i32
    %c0_i32_0 = arith.constant 0 : i32
    return %c0_i32 : i32
  }
  func.func @transform_3(%arg0: i32) -> (i32, i32) {
    %c0_i32 = arith.constant 0 : i32
    %c0_i32_0 = arith.constant 0 : i32
    return %arg0, %c0_i32 : i32, i32
  }
  func.func @transform_4(%arg0: i32) -> (i32, i32) {
    %c0_i32 = arith.constant 0 : i32
    %c0_i32_0 = arith.constant 0 : i32
    return %arg0, %c0_i32 : i32, i32
  }
}

</mosaic_0001>

<llo_original>
// kernel: tpu_custom_call.1
$region0: #{tpu_custom_call.1}
  #allocation0 [shape = 'u32[]', space=smem, size = 0x4, offset = 0x4, fixed_abs, tag = 'smem constant byte address 0x4 - core index']
  #allocation1 [shape = 'u32[144,128]{1,0:T(1,128)}', space=vmem, size = 0x12000, scoped, tag = 'internal scratch']
  #allocation2 [shape = 'f32[1]{0:T(128)S(6)}', space=smem, size = 0x200, scoped, tag = 'scoped memory for tpu_custom_call.1']
  %s0 = inlined_call_operand.hbm [shape: f32[8,96], index: 0, kind: input, shape index: {}]
  %s1 = inlined_call_operand.vmem [shape: f32[1,32], index: 1, kind: input, shape index: {}]
  %s2 = inlined_call_operand.<no memory space> [shape: f32[1], index: 2, kind: input, shape index: {}]
  %s3 = inlined_call_operand.hbm [shape: f32[8,32], index: 3, kind: output, shape index: {0}]
  %s4 = inlined_call_operand.vmem [shape: f32[8,1], index: 4, kind: output, shape index: {1}]
  %5 = xla_tuple %s3, %s4
  %s6 = sld [smem:[#allocation0]]
  $region34: #{tpu_custom_call.1} parent=0
    _
  %s8 = ssub.s32 1, %s6
  %s9 = scalar_select 0, %s8, %s6
  %10 = sst [smem:[#allocation2]] %s2
  $region1: #{tpu_custom_call.1} parent=0
    #allocation3 [shape = 'u8[4096]{0}', space=vmem, size = 0x1000, scoped, tag = 'input window, operand 0, single buffered']
    #allocation4 [shape = 's32[1]{0}', space=sflag, size = 0x4, scoped, tag = 'scoped memory for tpu_custom_call.1']
    #allocation5 [shape = 's32[1]{0}', space=sflag, size = 0x4, scoped, tag = 'scoped memory for tpu_custom_call.1']
    #allocation6 [shape = 'u8[4096]{0}', space=vmem, size = 0x1000, scoped, tag = 'output window, operand 0, single buffered']
    %11 = vsyncpa [#allocation4], 0
    %12 = vsyncpa [#allocation5], 0
    // Predicated region
    $region2: #{tpu_custom_call.1} parent=1 // pred_check
      _
    $region3: #{tpu_custom_call.1} parent=1 // pred_check_branch
      %14 = sbr.rel (0) target = $region5
    $region4: #{tpu_custom_call.1} parent=1 // pred_region
      %s16 = ssub.s32 128, 128
      %17 = vsyncadd [#allocation4], %s16
      %s19 = sshll.u32 [#allocation3], 4
      %s20 = int_to_ptr.vmem [resolvable:$true] %s19
      %22 = dma.hbm_to_vmem [thread:$0]  %s0, 128, %s20, [#allocation4]
    $region5: #{tpu_custom_call.1} parent=1 // pred_fallthru
      _
    // Predicated region
    $region6: #{tpu_custom_call.1} parent=1 // pred_check
      _
    $region7: #{tpu_custom_call.1} parent=1 // pred_check_branch
      %24 = sbr.rel (0) target = $region9
    $region8: #{tpu_custom_call.1} parent=1 // pred_region
      _
    $region9: #{tpu_custom_call.1} parent=1 // pred_fallthru
      _
    // Predicated region
    $region10: #{tpu_custom_call.1} parent=1 // pred_check
      _
    $region11: #{tpu_custom_call.1} parent=1 // pred_check_branch
      %26 = sbr.rel (0) target = $region13
    $region12: #{tpu_custom_call.1} parent=1 // pred_region
      _
    $region13: #{tpu_custom_call.1} parent=1 // pred_fallthru
      _
    // Predicated region
    $region14: #{tpu_custom_call.1} parent=1 // pred_check
      _
    $region15: #{tpu_custom_call.1} parent=1 // pred_check_branch
      %28 = sbr.rel (0) target = $region17
    $region16: #{tpu_custom_call.1} parent=1 // pred_region
      %29 = dma.done [#allocation4], 128
    $region17: #{tpu_custom_call.1} parent=1 // pred_fallthru
      _
    %v30 = vld [vmem:[#allocation3] sm:$0xff]
    %v31 = vmul.f32 %v30, 0.5
    %v32 = vtanh.pop %v31
    %v33 = vadd.f32 %v32, 1.0
    %v34 = vmul.f32 %v33, 0.5
    %36 = vrot.lane.b32.xlu0 %v30, 96
    %v37 = vpop.permute.xlu0 %36
    %v39 = vsub.f32 %v30, %v37
    %41 = vrot.lane.b32.xlu0 %v39, 96
    %v42 = vpop.permute.xlu0 %41
    %v44 = vmul.f32 %v34, %v42
    %46 = vrot.lane.b32.xlu0 %v44, 64
    %v47 = vpop.permute.xlu0 %46
    %v49 = vadd.f32 %v30, %v47
    %v50 = vld [vmem:[%s1] sm:$0x1]
    %v52 = vlaneseq
    %v53 = vshrl.u32 %v52, 7
    %v54 = vsub.s32 0, %v53
    %v55 = vrot.slane %v50, %v54
    %56 = vrot.lane.b32.xlu0 %v55, 64
    %v57 = vpop.permute.xlu0 %56
    %v59 = vmul.f32 %v49, %v57
    %61 = vrot.lane.b32.xlu0 %v59, 64
    %v62 = vpop.permute.xlu0 %61
    %vm64 = vcmask 261120
    %v65 = vsel %vm64, %v62, 0.0
    %66 = vadd.xlane.f32.xlu0 %v65
    %v67 = vpop.xlane.xlu0 %66
    %s68 = sld [smem:[#allocation2]]
    %v69 = vstv %s68
    %v70 = vadd.f32 %v67, %v69
    %72 = vrot.lane.b32.xlu0 %v49, 64
    %v73 = vpop.permute.xlu0 %72
    %75 = vst.msk [vmem:[#allocation6] sm:$0xff] %vm64, %v73
    %vm76 = vcmask 7168
    %77 = vst.msk [vmem:[%s4] sm:$0xff] %vm76, %v70
    // Predicated region
    $region18: #{tpu_custom_call.1} parent=1 // pred_check
      _
    $region19: #{tpu_custom_call.1} parent=1 // pred_check_branch
      %79 = sbr.rel (0) target = $region21
    $region20: #{tpu_custom_call.1} parent=1 // pred_region
      %s81 = ssub.s32 128, 128
      %82 = vsyncadd [#allocation5], %s81
      %s84 = sshll.u32 [#allocation6], 4
      %s85 = int_to_ptr.vmem [resolvable:$true] %s84
      %87 = dma.vmem_to_hbm [thread:$0]  %s85, 128, %s3, [#allocation5]
    $region21: #{tpu_custom_call.1} parent=1 // pred_fallthru
      _
    // Predicated region
    $region22: #{tpu_custom_call.1} parent=1 // pred_check
      _
    $region23: #{tpu_custom_call.1} parent=1 // pred_check_branch
      %89 = sbr.rel (0) target = $region25
    $region24: #{tpu_custom_call.1} parent=1 // pred_region
      _
    $region25: #{tpu_custom_call.1} parent=1 // pred_fallthru
      _
    // Predicated region
    $region26: #{tpu_custom_call.1} parent=1 // pred_check
      _
    $region27: #{tpu_custom_call.1} parent=1 // pred_check_branch
      %91 = sbr.rel (0) target = $region29
    $region28: #{tpu_custom_call.1} parent=1 // pred_region
      %92 = dma.done [#allocation5], 128
    $region29: #{tpu_custom_call.1} parent=1 // pred_fallthru
      _
    // Predicated region
    $region30: #{tpu_custom_call.1} parent=1 // pred_check
      _
    $region31: #{tpu_custom_call.1} parent=1 // pred_check_branch
      %94 = sbr.rel (0) target = $region33
    $region32: #{tpu_custom_call.1} parent=1 // pred_region
      _
    $region33: #{tpu_custom_call.1} parent=1 // pred_fallthru
      _
    %95 = vsyncpa [#allocation4], 1
    %96 = vsyncpa [#allocation5], 1

</llo_original>
